<compile_context>
chip_gen: v6e
topology: v6e:2x2x1
jax: 0.10.0
libtpu: 0.0.40
codegen_flags: <defaults>
</compile_context>

<pallas_src>
import jax
import jax.numpy as jnp
from jax.experimental import pallas as pl
from jax.experimental.pallas import tpu as pltpu


def _round_up(a: int, m: int) -> int:
    return ((a + m - 1) // m) * m


# --------------------------------------------------------------------------- #
# Pallas kernel: token-wise MLP block on a compact tile of selected rows.
# --------------------------------------------------------------------------- #
def _mod_block_kernel(xg_ref, rw_ref, w1_ref, b1_ref, w2_ref, b2_ref, upd_ref):
    """upd = router_weight * (GELU(x @ W1 + b1) @ W2 + b2)  (scatter_add src)."""
    x = xg_ref[0]                                   # [TK, Dp] f32, gathered rows
    rw = rw_ref[0]                                  # [TK, 1]  f32, softmax weights

    # bf16 MXU matmuls with f32 accumulation.
    h = jnp.dot(x.astype(jnp.bfloat16), w1_ref[...],
                preferred_element_type=jnp.float32)
    h = h + b1_ref[...]
    # TODO(synk): PyTorch nn.GELU defaults to exact erf; tanh approximation is
    # used here (and in the in-script reference) for a clean EUP lowering.
    h = jax.nn.gelu(h, approximate=True)
    y = jnp.dot(h.astype(jnp.bfloat16), w2_ref[...],
                preferred_element_type=jnp.float32)
    y = y + b2_ref[...]

    upd_ref[0] = rw * y


# --------------------------------------------------------------------------- #
# One-time parameter preparation (hoisted out of the forward pass).
# --------------------------------------------------------------------------- #
def prepare_block_params(w1, b1, w2, b2):
    """Pad the model dim to a multiple of 128 (lane-dense tiles / unmasked
    stores) and cast the matmul weights to bf16 for the MXU.  Call once."""
    d = w1.shape[0]
    dp = _round_up(d, 128)
    pad2 = ((0, dp - d), (0, dp - d))
    padb = ((0, 0), (0, dp - d))
    return {
        "d": d,
        "dp": dp,
        "w1": jnp.pad(w1, pad2).astype(jnp.bfloat16),
        "b1": jnp.pad(jnp.reshape(b1, (1, -1)), padb).astype(jnp.float32),
        "w2": jnp.pad(w2, pad2).astype(jnp.bfloat16),
        "b2": jnp.pad(jnp.reshape(b2, (1, -1)), padb).astype(jnp.float32),
    }


# --------------------------------------------------------------------------- #
# Generation-aware VMEM budget & row-tile selection.
# --------------------------------------------------------------------------- #
def _vmem_budget_bytes() -> int:
    """~100 MiB on 128-MiB v5e/v6e, 48 MiB on 64-MiB v7x."""
    mib = 1024 * 1024
    try:
        phys = int(pltpu.get_tpu_info().vmem_capacity_bytes)
    except Exception:
        phys = 64 * mib                      # conservative (v7x-sized) fallback
    return int(min(phys - 16 * mib, 100 * mib))


def _pick_row_tile(k: int, dp: int, budget: int) -> int:
    """Largest MXU-friendly row tile whose working set fits the VMEM budget.

    Estimate per grid step: double-buffered f32 in/out tiles (16*TK*Dp), ~f32
    hidden + bf16 staging (8*TK*Dp), single-buffered bf16 W1+W2 (4*Dp^2).
    """
    weights = 4 * dp * dp
    k8 = _round_up(k, 8)
    for tk in (1024, 512, 256, 128, 64, 32, 16, 8):
        if tk <= k8 and weights + 24 * tk * dp <= 0.9 * budget:
            return tk
    # TODO(synk): when bf16 weights alone exceed VMEM (very large D), add a
    # third "arbitrary" grid axis tiling the hidden dim with an f32 accumulator
    # scratch instead of shrinking the row tile.
    return 8


def _build_block_call(b, kp, tk, dp, budget, single_buffer_weights):
    row_spec = pl.BlockSpec((1, tk, dp), lambda bi, ki: (bi, ki, 0))
    rw_spec = pl.BlockSpec((1, tk, 1), lambda bi, ki: (bi, ki, 0))
    wkw = {}
    if single_buffer_weights:
        # Constant index_map => the second pipeline buffer is pure VMEM waste.
        wkw = dict(pipeline_mode=pl.Buffered(buffer_count=1))
    w_spec = pl.BlockSpec((dp, dp), lambda bi, ki: (0, 0), **wkw)
    bias_spec = pl.BlockSpec((1, dp), lambda bi, ki: (0, 0), **wkw)
    return pl.pallas_call(
        _mod_block_kernel,
        out_shape=jax.ShapeDtypeStruct((b, kp, dp), jnp.float32),
        grid_spec=pltpu.PrefetchScalarGridSpec(
            num_scalar_prefetch=0,
            grid=(b, kp // tk),
            in_specs=[row_spec, rw_spec, w_spec, bias_spec, w_spec, bias_spec],
            out_specs=row_spec,
        ),
        compiler_params=pltpu.CompilerParams(
            dimension_semantics=("parallel", "parallel"),
            vmem_limit_bytes=budget,
        ),
    )


# --------------------------------------------------------------------------- #
# MoD forward.
# --------------------------------------------------------------------------- #
def mod_forward(x, wr, block_params, capacity_factor):
    """Router + top-k routing in the wrapper, compact MLP block in a Pallas
    kernel, scatter_add of the weighted block output back into the residual."""
    b, s, d = x.shape
    if d != block_params["d"]:
        raise ValueError("x feature dim does not match prepared params")
    top_k = int(s * capacity_factor)
    if top_k < 1:
        raise ValueError("int(seq_len * capacity_factor) must be >= 1")
    dp = block_params["dp"]

    # ---- routing (tiny, O(B*S*D)) -------------------------------------------
    router_logits = (x @ wr)[..., 0]                          # [B, S]
    vals, idx = jax.lax.top_k(router_logits, top_k)           # [B, K]
    sel_idx = jnp.sort(idx, axis=1)                           # token order
    order = jnp.argsort(idx, axis=1)
    w_soft = jax.nn.softmax(vals, axis=-1)                    # softmax over top-k logits
    r_w = jnp.take_along_axis(w_soft, order, axis=1)          # [B, K], sel_idx order

    # ---- gather selected rows to a compact array -----------------------------
    xg = jnp.take_along_axis(x, sel_idx[..., None], axis=1)   # [B, K, D]

    # ---- pad to MXU / lane-friendly tiles ------------------------------------
    budget = _vmem_budget_bytes()
    tk = _pick_row_tile(top_k, dp, budget)
    kp = _round_up(top_k, tk)
    xg = jnp.pad(xg, ((0, 0), (0, kp - top_k), (0, dp - d)))
    rw = jnp.pad(r_w, ((0, 0), (0, kp - top_k)))[..., None]   # [B, Kp, 1]
    # NOTE: rw is a lane-width-1 tile, but it is compact in K (K*4 bytes/batch,
    # <1% of the x stream); a fully fused variant would carry it via scalar
    # prefetch together with sel_idx.

    # ---- compact block kernel (dominant FLOPs) -------------------------------
    upd = None
    last_err = None
    for single_buffer_weights in (True, False):
        try:
            call = _build_block_call(b, kp, tk, dp, budget, single_buffer_weights)
            upd = call(xg, rw, block_params["w1"], block_params["b1"],
                       block_params["w2"], block_params["b2"])
            break
        except Exception as e:   # fallback for jax without BlockSpec pipeline_mode
            last_err = e
    if upd is None:
        raise last_err
    upd = upd[:, :top_k, :d]                                  # drop row/lane padding

    # ---- scatter_add back into the residual stream ---------------------------
    # TODO(synk): fuse this scatter (and the gather above) into the kernel via
    # scalar-prefetched sel_idx + manual DMA + input_output_aliases(x -> out).
    out = x.at[jnp.arange(b)[:, None], sel_idx].add(upd)
    return out


# --------------------------------------------------------------------------- #
# Pure-JAX reference mirroring the PyTorch module's control flow.
# --------------------------------------------------------------------------- #
def mod_reference(x, wr, w1, b1, w2, b2, capacity_factor):
    """topk -> sort -> gather -> block -> softmax -> weight -> scatter_add,
    with the same bf16-in / f32-accumulate matmuls and tanh-GELU as the kernel."""
    b, s, d = x.shape
    top_k = int(s * capacity_factor)
    router_logits = (x @ wr)[..., 0]
    vals, idx = jax.lax.top_k(router_logits, top_k)
    sel_idx = jnp.sort(idx, axis=1)
    order = jnp.argsort(idx, axis=1)
    gathered = jnp.take_along_axis(x, sel_idx[..., None], axis=1)    # [B, K, D]
    h = jnp.einsum("bkd,de->bke", gathered.astype(jnp.bfloat16),
                   w1.astype(jnp.bfloat16),
                   preferred_element_type=jnp.float32) + b1
    h = jax.nn.gelu(h, approximate=True)
    y = jnp.einsum("bkd,de->bke", h.astype(jnp.bfloat16),
                   w2.astype(jnp.bfloat16),
                   preferred_element_type=jnp.float32) + b2
    w_soft = jax.nn.softmax(vals, axis=1)
    r_w = jnp.take_along_axis(w_soft, order, axis=1)[..., None]
    return x.at[jnp.arange(b)[:, None], sel_idx].add(r_w * y)


if __name__ == "__main__":
    b, s, d = 2, 8, 32
    capacity_factor = 0.5

    key = jax.random.PRNGKey(0)
    ks = jax.random.split(key, 6)
    x = jax.random.normal(ks[0], (b, s, d), dtype=jnp.float32)
    wr = jax.random.normal(ks[1], (d, 1), dtype=jnp.float32) / jnp.sqrt(d)   # router
    w1 = jax.random.normal(ks[2], (d, d), dtype=jnp.float32) / jnp.sqrt(d)   # block
    b1 = jax.random.normal(ks[3], (1, d), dtype=jnp.float32) * 0.01
    w2 = jax.random.normal(ks[4], (d, d), dtype=jnp.float32) / jnp.sqrt(d)
    b2 = jax.random.normal(ks[5], (1, d), dtype=jnp.float32) * 0.01

    params = prepare_block_params(w1, b1, w2, b2)     # one-time bf16 cast + pad
    out = mod_forward(x, wr, params, capacity_factor)
    out = jax.block_until_ready(out)

    ref = mod_reference(x, wr, w1, b1, w2, b2, capacity_factor)
    err = float(jnp.max(jnp.abs(out - ref)))
    assert out.shape == (b, s, d)
    assert jnp.allclose(out, ref, atol=2e-3, rtol=2e-3), f"max abs err = {err}"

    print("KERNEL_OK")
</pallas_src>

<mosaic_0001>
module attributes {stable_mosaic.version = 11 : i64} {
  func.func @_mod_block_kernel(%arg0: i32, %arg1: i32, %arg2: memref<1x8x128xf32, #tpu.memory_space<vmem>>, %arg3: memref<1x8x1xf32, #tpu.memory_space<vmem>>, %arg4: memref<128x128xbf16, #tpu.memory_space<vmem>>, %arg5: memref<1x128xf32, #tpu.memory_space<vmem>>, %arg6: memref<128x128xbf16, #tpu.memory_space<vmem>>, %arg7: memref<1x128xf32, #tpu.memory_space<vmem>>, %arg8: memref<1x8x128xf32, #tpu.memory_space<vmem>>) attributes {dimension_semantics = [#tpu.dimension_semantics<parallel>, #tpu.dimension_semantics<parallel>], iteration_bounds = array<i64: 2, 1>, scalar_prefetch = 0 : i64, scratch_operands = 0 : i64, tpu.core_type = #tpu.core_type<tc>, window_params = [{transform_indices = @transform_0, window_bounds = array<i64: 1, 8, 128>}, {transform_indices = @transform_1, window_bounds = array<i64: 1, 8, 1>}, {pipeline_mode = #tpu.pipeline_mode<synchronous>, transform_indices = @transform_2, window_bounds = array<i64: 128, 128>}, {pipeline_mode = #tpu.pipeline_mode<synchronous>, transform_indices = @transform_3, window_bounds = array<i64: 1, 128>}, {pipeline_mode = #tpu.pipeline_mode<synchronous>, transform_indices = @transform_4, window_bounds = array<i64: 128, 128>}, {pipeline_mode = #tpu.pipeline_mode<synchronous>, transform_indices = @transform_5, window_bounds = array<i64: 1, 128>}, {transform_indices = @transform_6, window_bounds = array<i64: 1, 8, 128>}]} {
    %c0 = arith.constant 0 : index
    %c0_0 = arith.constant 0 : index
    %c0_1 = arith.constant 0 : index
    %0 = vector.load %arg2[%c0, %c0_0, %c0_1] : memref<1x8x128xf32, #tpu.memory_space<vmem>>, vector<1x8x128xf32>
    %1 = vector.shape_cast %0 : vector<1x8x128xf32> to vector<8x128xf32>
    %c0_2 = arith.constant 0 : index
    %c0_3 = arith.constant 0 : index
    %c0_4 = arith.constant 0 : index
    %2 = vector.load %arg3[%c0_2, %c0_3, %c0_4] : memref<1x8x1xf32, #tpu.memory_space<vmem>>, vector<1x8x1xf32>
    %3 = vector.shape_cast %2 : vector<1x8x1xf32> to vector<8x1xf32>
    %4 = arith.truncf %1 : vector<8x128xf32> to vector<8x128xbf16>
    %c0_5 = arith.constant 0 : index
    %c0_6 = arith.constant 0 : index
    %5 = vector.load %arg4[%c0_5, %c0_6] : memref<128x128xbf16, #tpu.memory_space<vmem>>, vector<128x128xbf16>
    %cst = arith.constant dense<0.000000e+00> : vector<8x128xf32>
    %6 = tpu.matmul %4, %5, %cst {dimension_numbers = #tpu.dot_dimension_numbers<[1], [0], [0], [1], [0, 0, 1, 1], [], []>} : vector<8x128xbf16>, vector<128x128xbf16>, vector<8x128xf32> -> vector<8x128xf32>
    %c0_7 = arith.constant 0 : index
    %c0_8 = arith.constant 0 : index
    %7 = vector.load %arg5[%c0_7, %c0_8] : memref<1x128xf32, #tpu.memory_space<vmem>>, vector<1x128xf32>
    %8 = vector.broadcast %7 : vector<1x128xf32> to vector<8x128xf32>
    %9 = arith.addf %6, %8 : vector<8x128xf32>
    %10 = arith.mulf %9, %9 : vector<8x128xf32>
    %11 = arith.mulf %9, %10 : vector<8x128xf32>
    %cst_9 = arith.constant 4.471500e-02 : f32
    %12 = vector.broadcast %cst_9 : f32 to vector<8x128xf32>
    %13 = arith.mulf %12, %11 : vector<8x128xf32>
    %14 = arith.addf %9, %13 : vector<8x128xf32>
    %cst_10 = arith.constant 0.797884583 : f32
    %15 = vector.broadcast %cst_10 : f32 to vector<8x128xf32>
    %16 = arith.mulf %15, %14 : vector<8x128xf32>
    %17 = math.tanh %16 : vector<8x128xf32>
    %cst_11 = arith.constant 1.000000e+00 : f32
    %18 = vector.broadcast %cst_11 : f32 to vector<8x128xf32>
    %19 = arith.addf %18, %17 : vector<8x128xf32>
    %cst_12 = arith.constant 5.000000e-01 : f32
    %20 = vector.broadcast %cst_12 : f32 to vector<8x128xf32>
    %21 = arith.mulf %20, %19 : vector<8x128xf32>
    %22 = arith.mulf %9, %21 : vector<8x128xf32>
    %23 = arith.truncf %22 : vector<8x128xf32> to vector<8x128xbf16>
    %c0_13 = arith.constant 0 : index
    %c0_14 = arith.constant 0 : index
    %24 = vector.load %arg6[%c0_13, %c0_14] : memref<128x128xbf16, #tpu.memory_space<vmem>>, vector<128x128xbf16>
    %cst_15 = arith.constant dense<0.000000e+00> : vector<8x128xf32>
    %25 = tpu.matmul %23, %24, %cst_15 {dimension_numbers = #tpu.dot_dimension_numbers<[1], [0], [0], [1], [0, 0, 1, 1], [], []>} : vector<8x128xbf16>, vector<128x128xbf16>, vector<8x128xf32> -> vector<8x128xf32>
    %c0_16 = arith.constant 0 : index
    %c0_17 = arith.constant 0 : index
    %26 = vector.load %arg7[%c0_16, %c0_17] : memref<1x128xf32, #tpu.memory_space<vmem>>, vector<1x128xf32>
    %27 = vector.broadcast %26 : vector<1x128xf32> to vector<8x128xf32>
    %28 = arith.addf %25, %27 : vector<8x128xf32>
    %29 = vector.broadcast %3 : vector<8x1xf32> to vector<8x128xf32>
    %30 = arith.mulf %29, %28 : vector<8x128xf32>
    %c0_18 = arith.constant 0 : index
    %c0_19 = arith.constant 0 : index
    %c0_20 = arith.constant 0 : index
    %31 = vector.load %arg8[%c0_18, %c0_19, %c0_20] : memref<1x8x128xf32, #tpu.memory_space<vmem>>, vector<1x8x128xf32>
    %32 = vector.shape_cast %31 : vector<1x8x128xf32> to vector<8x128xf32>
    %33 = vector.shape_cast %30 : vector<8x128xf32> to vector<1x8x128xf32>
    tpu.vector_store %arg8[%c0_18, %c0_19, %c0_20], %33 {strides = array<i32>} : memref<1x8x128xf32, #tpu.memory_space<vmem>>, vector<1x8x128xf32>,
    return
  }
  func.func @transform_0(%arg0: i32, %arg1: i32) -> (i32, i32, i32) {
    %c0_i32 = arith.constant 0 : i32
    %c0_i32_0 = arith.constant 0 : i32
    return %arg0, %arg1, %c0_i32 : i32, i32, i32
  }
  func.func @transform_1(%arg0: i32, %arg1: i32) -> (i32, i32, i32) {
    %c0_i32 = arith.constant 0 : i32
    %c0_i32_0 = arith.constant 0 : i32
    return %arg0, %arg1, %c0_i32 : i32, i32, i32
  }
  func.func @transform_2(%arg0: i32, %arg1: i32) -> (i32, i32) {
    %c0_i32 = arith.constant 0 : i32
    %c0_i32_0 = arith.constant 0 : i32
    %c0_i32_1 = arith.constant 0 : i32
    return %c0_i32, %c0_i32_0 : i32, i32
  }
  func.func @transform_3(%arg0: i32, %arg1: i32) -> (i32, i32) {
    %c0_i32 = arith.constant 0 : i32
    %c0_i32_0 = arith.constant 0 : i32
    %c0_i32_1 = arith.constant 0 : i32
    return %c0_i32, %c0_i32_0 : i32, i32
  }
  func.func @transform_4(%arg0: i32, %arg1: i32) -> (i32, i32) {
    %c0_i32 = arith.constant 0 : i32
    %c0_i32_0 = arith.constant 0 : i32
    %c0_i32_1 = arith.constant 0 : i32
    return %c0_i32, %c0_i32_0 : i32, i32
  }
  func.func @transform_5(%arg0: i32, %arg1: i32) -> (i32, i32) {
    %c0_i32 = arith.constant 0 : i32
    %c0_i32_0 = arith.constant 0 : i32
    %c0_i32_1 = arith.constant 0 : i32
    return %c0_i32, %c0_i32_0 : i32, i32
  }
  func.func @transform_6(%arg0: i32, %arg1: i32) -> (i32, i32, i32) {
    %c0_i32 = arith.constant 0 : i32
    %c0_i32_0 = arith.constant 0 : i32
    return %arg0, %arg1, %c0_i32 : i32, i32, i32
  }
}

module attributes {stable_mosaic.version = 11 : i64} {
  func.func @_mod_block_kernel(%arg0: i32, %arg1: i32, %arg2: memref<1x8x128xf32, #tpu.memory_space<vmem>>, %arg3: memref<1x8x1xf32, #tpu.memory_space<vmem>>, %arg4: memref<128x128xbf16, #tpu.memory_space<vmem>>, %arg5: memref<1x128xf32, #tpu.memory_space<vmem>>, %arg6: memref<128x128xbf16, #tpu.memory_space<vmem>>, %arg7: memref<1x128xf32, #tpu.memory_space<vmem>>, %arg8: memref<1x8x128xf32, #tpu.memory_space<vmem>>) attributes {dimension_semantics = [#tpu.dimension_semantics<parallel>, #tpu.dimension_semantics<parallel>], iteration_bounds = array<i64: 2, 1>, scalar_prefetch = 0 : i64, scratch_operands = 0 : i64, tpu.core_type = #tpu.core_type<tc>, window_params = [{transform_indices = @transform_0, window_bounds = array<i64: 1, 8, 128>}, {transform_indices = @transform_1, window_bounds = array<i64: 1, 8, 1>}, {pipeline_mode = #tpu.pipeline_mode<synchronous>, transform_indices = @transform_2, window_bounds = array<i64: 128, 128>}, {pipeline_mode = #tpu.pipeline_mode<synchronous>, transform_indices = @transform_3, window_bounds = array<i64: 1, 128>}, {pipeline_mode = #tpu.pipeline_mode<synchronous>, transform_indices = @transform_4, window_bounds = array<i64: 128, 128>}, {pipeline_mode = #tpu.pipeline_mode<synchronous>, transform_indices = @transform_5, window_bounds = array<i64: 1, 128>}, {transform_indices = @transform_6, window_bounds = array<i64: 1, 8, 128>}]} {
    %c0 = arith.constant 0 : index
    %c0_0 = arith.constant 0 : index
    %c0_1 = arith.constant 0 : index
    %0 = vector.load %arg2[%c0, %c0_0, %c0_1] : memref<1x8x128xf32, #tpu.memory_space<vmem>>, vector<1x8x128xf32>
    %1 = vector.shape_cast %0 : vector<1x8x128xf32> to vector<8x128xf32>
    %c0_2 = arith.constant 0 : index
    %c0_3 = arith.constant 0 : index
    %c0_4 = arith.constant 0 : index
    %2 = vector.load %arg3[%c0_2, %c0_3, %c0_4] : memref<1x8x1xf32, #tpu.memory_space<vmem>>, vector<1x8x1xf32>
    %3 = vector.shape_cast %2 : vector<1x8x1xf32> to vector<8x1xf32>
    %4 = arith.truncf %1 : vector<8x128xf32> to vector<8x128xbf16>
    %c0_5 = arith.constant 0 : index
    %c0_6 = arith.constant 0 : index
    %5 = vector.load %arg4[%c0_5, %c0_6] : memref<128x128xbf16, #tpu.memory_space<vmem>>, vector<128x128xbf16>
    %cst = arith.constant dense<0.000000e+00> : vector<8x128xf32>
    %6 = tpu.matmul %4, %5, %cst {dimension_numbers = #tpu.dot_dimension_numbers<[1], [0], [0], [1], [0, 0, 1, 1], [], []>} : vector<8x128xbf16>, vector<128x128xbf16>, vector<8x128xf32> -> vector<8x128xf32>
    %c0_7 = arith.constant 0 : index
    %c0_8 = arith.constant 0 : index
    %7 = vector.load %arg5[%c0_7, %c0_8] : memref<1x128xf32, #tpu.memory_space<vmem>>, vector<1x128xf32>
    %8 = vector.broadcast %7 : vector<1x128xf32> to vector<8x128xf32>
    %9 = arith.addf %6, %8 : vector<8x128xf32>
    %10 = arith.mulf %9, %9 : vector<8x128xf32>
    %11 = arith.mulf %9, %10 : vector<8x128xf32>
    %cst_9 = arith.constant 4.471500e-02 : f32
    %12 = vector.broadcast %cst_9 : f32 to vector<8x128xf32>
    %13 = arith.mulf %12, %11 : vector<8x128xf32>
    %14 = arith.addf %9, %13 : vector<8x128xf32>
    %cst_10 = arith.constant 0.797884583 : f32
    %15 = vector.broadcast %cst_10 : f32 to vector<8x128xf32>
    %16 = arith.mulf %15, %14 : vector<8x128xf32>
    %17 = math.tanh %16 : vector<8x128xf32>
    %cst_11 = arith.constant 1.000000e+00 : f32
    %18 = vector.broadcast %cst_11 : f32 to vector<8x128xf32>
    %19 = arith.addf %18, %17 : vector<8x128xf32>
    %cst_12 = arith.constant 5.000000e-01 : f32
    %20 = vector.broadcast %cst_12 : f32 to vector<8x128xf32>
    %21 = arith.mulf %20, %19 : vector<8x128xf32>
    %22 = arith.mulf %9, %21 : vector<8x128xf32>
    %23 = arith.truncf %22 : vector<8x128xf32> to vector<8x128xbf16>
    %c0_13 = arith.constant 0 : index
    %c0_14 = arith.constant 0 : index
    %24 = vector.load %arg6[%c0_13, %c0_14] : memref<128x128xbf16, #tpu.memory_space<vmem>>, vector<128x128xbf16>
    %cst_15 = arith.constant dense<0.000000e+00> : vector<8x128xf32>
    %25 = tpu.matmul %23, %24, %cst_15 {dimension_numbers = #tpu.dot_dimension_numbers<[1], [0], [0], [1], [0, 0, 1, 1], [], []>} : vector<8x128xbf16>, vector<128x128xbf16>, vector<8x128xf32> -> vector<8x128xf32>
    %c0_16 = arith.constant 0 : index
    %c0_17 = arith.constant 0 : index
    %26 = vector.load %arg7[%c0_16, %c0_17] : memref<1x128xf32, #tpu.memory_space<vmem>>, vector<1x128xf32>
    %27 = vector.broadcast %26 : vector<1x128xf32> to vector<8x128xf32>
    %28 = arith.addf %25, %27 : vector<8x128xf32>
    %29 = vector.broadcast %3 : vector<8x1xf32> to vector<8x128xf32>
    %30 = arith.mulf %29, %28 : vector<8x128xf32>
    %c0_18 = arith.constant 0 : index
    %c0_19 = arith.constant 0 : index
    %c0_20 = arith.constant 0 : index
    %31 = vector.load %arg8[%c0_18, %c0_19, %c0_20] : memref<1x8x128xf32, #tpu.memory_space<vmem>>, vector<1x8x128xf32>
    %32 = vector.shape_cast %31 : vector<1x8x128xf32> to vector<8x128xf32>
    %33 = vector.shape_cast %30 : vector<8x128xf32> to vector<1x8x128xf32>
    tpu.vector_store %arg8[%c0_18, %c0_19, %c0_20], %33 {strides = array<i32>} : memref<1x8x128xf32, #tpu.memory_space<vmem>>, vector<1x8x128xf32>,
    return
  }
  func.func @transform_0(%arg0: i32, %arg1: i32) -> (i32, i32, i32) {
    %c0_i32 = arith.constant 0 : i32
    %c0_i32_0 = arith.constant 0 : i32
    return %arg0, %arg1, %c0_i32 : i32, i32, i32
  }
  func.func @transform_1(%arg0: i32, %arg1: i32) -> (i32, i32, i32) {
    %c0_i32 = arith.constant 0 : i32
    %c0_i32_0 = arith.constant 0 : i32
    return %arg0, %arg1, %c0_i32 : i32, i32, i32
  }
  func.func @transform_2(%arg0: i32, %arg1: i32) -> (i32, i32) {
    %c0_i32 = arith.constant 0 : i32
    %c0_i32_0 = arith.constant 0 : i32
    %c0_i32_1 = arith.constant 0 : i32
    return %c0_i32, %c0_i32_0 : i32, i32
  }
  func.func @transform_3(%arg0: i32, %arg1: i32) -> (i32, i32) {
    %c0_i32 = arith.constant 0 : i32
    %c0_i32_0 = arith.constant 0 : i32
    %c0_i32_1 = arith.constant 0 : i32
    return %c0_i32, %c0_i32_0 : i32, i32
  }
  func.func @transform_4(%arg0: i32, %arg1: i32) -> (i32, i32) {
    %c0_i32 = arith.constant 0 : i32
    %c0_i32_0 = arith.constant 0 : i32
    %c0_i32_1 = arith.constant 0 : i32
    return %c0_i32, %c0_i32_0 : i32, i32
  }
  func.func @transform_5(%arg0: i32, %arg1: i32) -> (i32, i32) {
    %c0_i32 = arith.constant 0 : i32
    %c0_i32_0 = arith.constant 0 : i32
    %c0_i32_1 = arith.constant 0 : i32
    return %c0_i32, %c0_i32_0 : i32, i32
  }
  func.func @transform_6(%arg0: i32, %arg1: i32) -> (i32, i32, i32) {
    %c0_i32 = arith.constant 0 : i32
    %c0_i32_0 = arith.constant 0 : i32
    return %arg0, %arg1, %c0_i32 : i32, i32, i32
  }
}

</mosaic_0001>

<llo_original>
// kernel: tpu_custom_call.1
$region0: #{tpu_custom_call.1}
  #allocation0 [shape = 'u32[]', space=smem, size = 0x4, offset = 0x4, fixed_abs, tag = 'smem constant byte address 0x4 - core index']
  #allocation1 [shape = 'u32[144,128]{1,0:T(1,128)}', space=vmem, size = 0x12000, scoped, tag = 'internal scratch']
  %s0 = inlined_call_operand.vmem [shape: f32[2,8,128], index: 0, kind: input, shape index: {}]
  %s1 = inlined_call_operand.vmem [shape: f32[2,8,1], index: 1, kind: input, shape index: {}]
  %s2 = inlined_call_operand.hbm [shape: bf16[128,128], index: 2, kind: input, shape index: {}]
  %s3 = inlined_call_operand.vmem [shape: f32[1,128], index: 3, kind: input, shape index: {}]
  %s4 = inlined_call_operand.hbm [shape: bf16[128,128], index: 4, kind: input, shape index: {}]
  %s5 = inlined_call_operand.vmem [shape: f32[1,128], index: 5, kind: input, shape index: {}]
  %s6 = inlined_call_operand.hbm [shape: f32[2,8,128], index: 6, kind: output, shape index: {}]
  %s7 = sld [smem:[#allocation0]]
  $region65: #{tpu_custom_call.1} parent=0
    _
  %s9 = ssub.s32 1, %s7
  %s10 = scalar_select 0, %s9, %s7
  $region1: #{tpu_custom_call.1} parent=0
    #allocation2 [shape = 'u8[32768]{0}', space=vmem, size = 0x8000, scoped, tag = 'input window, operand 2, single buffered']
    #allocation3 [shape = 's32[2]{0}', space=sflag, size = 0x8, scoped, tag = 'scoped memory for tpu_custom_call.1']
    #allocation4 [shape = 's32[2]{0}', space=sflag, size = 0x8, scoped, tag = 'scoped memory for tpu_custom_call.1']
    #allocation5 [shape = 'u8[32768]{0}', space=vmem, size = 0x8000, scoped, tag = 'input window, operand 4, single buffered']
    #allocation6 [shape = 's32[1]{0}', space=sflag, size = 0x4, scoped, tag = 'scoped memory for tpu_custom_call.1']
    #allocation7 [shape = 'u8[8192]{0}', space=vmem, size = 0x2000, scoped, tag = 'output window, operand 0']
    %11 = vsyncpa [#allocation3], 0
    %12 = vsyncpa [#allocation6], 0
    %13 = vsyncpa [#allocation4], 0
    %s14 = scalar_lea.sflag [#allocation4], 1
    %15 = vsyncpa %s14, 0
    loop: start=0, step=1, limit=4
    $region2: #{tpu_custom_call.1} parent=1 // loop_pre_header
      _
    $region3: #{tpu_custom_call.1} parent=1 // loop_header
      %s17 = sphi 0, %s21
      %p18 = scmp.ge.s32.totalorder %s17, 4
      %s24 = sphi 0, %s36
      %s25 = sphi 0, %s32
      %s26 = sphi 0, %s24
      %s27 = sphi 0, %s25
      %s28 = sphi 0, %s26
      %s29 = sphi 0, %s27
      %s41 = sphi 0, %s43
      %s44 = sphi 0, %s41
      %s45 = sphi 0, %s44
      %s61 = sphi 0, %s45
      %s69 = sphi 0, %s71
      %s72 = sphi 0, %s69
      %s73 = sphi 0, %s72
      %s89 = sphi 0, %s73
      %s93 = sphi 0, %s93
      %s95 = sphi 0, %s93
      %s96 = sphi 0, %s95
      %s110 = sphi 0, %s96
      %s114 = sphi 0, %s114
      %s116 = sphi 0, %s114
      %s117 = sphi 0, %s116
      %s131 = sphi 0, %s117
      %s135 = sphi 0, %s135
      %s137 = sphi 0, %s135
      %s138 = sphi 0, %s137
      %s152 = sphi 0, %s138
      %s156 = sphi 0, %s156
      %s158 = sphi 0, %s156
      %s159 = sphi 0, %s158
      %s173 = sphi 0, %s159
      %s181 = sphi 0, %s183
      %s184 = sphi 0, %s181
      %s185 = sphi 0, %s184
      %s201 = sphi 0, %s185
    $region4: #{tpu_custom_call.1} parent=1 // loop_header_branch
      %20 = sbr.rel (%p18) target = $region8
    $region5: #{tpu_custom_call.1} parent=1 // loop_body
      %s22 = ssub.s32 %s17, 1
      %s23 = ssub.s32 %s17, 2
      %s30 = sadd.s32 1, %s25
      %p31 = scmp.ge.s32.totalorder %s30, 1
      %s32 = scalar_select %p31, 0, %s30
      %s33 = sadd.s32 1, %s24
      %s34 = scalar_select %p31, %s33, %s24
      %p35 = scmp.ge.s32.totalorder %s34, 2
      %s36 = scalar_select %p35, 0, %s34
      %s37 = ssub.s32 %s24, %s36
      %s38 = ssub.s32 %s25, %s32
      %s39 = sor.u32 %s37, %s38
      %p40 = scmp.eq.s32.totalorder %s39, 0
      %s42 = sadd.s32 %s41, 1
      %s43 = scalar_select %p40, %s41, %s42
      %p46 = pneg %p40
      %p47 = scmp.eq.s32.totalorder %s17, 1
      %p48 = por %p46, %p47
      %p49 = scmp.ne.s32.totalorder %s41, %s44
      %p50 = scmp.eq.s32.totalorder %s17, 0
      %p51 = por %p49, %p50
      %p52 = scmp.ne.s32.totalorder %s41, %s44
      %p53 = scmp.eq.s32.totalorder %s22, 1
      %p54 = por %p52, %p53
      %p55 = scmp.ne.s32.totalorder %s44, %s45
      %p56 = scmp.eq.s32.totalorder %s22, 0
      %p57 = por %p55, %p56
      %p58 = scmp.ne.s32.totalorder %s44, %s45
      %p59 = scmp.eq.s32.totalorder %s23, 1
      %p60 = por %p58, %p59
      %p62 = scmp.ne.s32.totalorder %s45, %s61
      %p63 = scmp.eq.s32.totalorder %s23, 0
      %p64 = por %p62, %p63
      %s65 = ssub.s32 %s24, %s36
      %s66 = ssub.s32 %s25, %s32
      %s67 = sor.u32 %s65, %s66
      %p68 = scmp.eq.s32.totalorder %s67, 0
      %s70 = sadd.s32 %s69, 1
      %s71 = scalar_select %p68, %s69, %s70
      %p74 = pneg %p68
      %p75 = scmp.eq.s32.totalorder %s17, 1
      %p76 = por %p74, %p75
      %p77 = scmp.ne.s32.totalorder %s69, %s72
      %p78 = scmp.eq.s32.totalorder %s17, 0
      %p79 = por %p77, %p78
      %p80 = scmp.ne.s32.totalorder %s69, %s72
      %p81 = scmp.eq.s32.totalorder %s22, 1
      %p82 = por %p80, %p81
      %p83 = scmp.ne.s32.totalorder %s72, %s73
      %p84 = scmp.eq.s32.totalorder %s22, 0
      %p85 = por %p83, %p84
      %p86 = scmp.ne.s32.totalorder %s72, %s73
      %p87 = scmp.eq.s32.totalorder %s23, 1
      %p88 = por %p86, %p87
      %p90 = scmp.ne.s32.totalorder %s73, %s89
      %p91 = scmp.eq.s32.totalorder %s23, 0
      %p92 = por %p90, %p91
      %s94 = sadd.s32 %s93, 1
      %p97 = scmp.eq.s32.totalorder %s17, 1
      %p98 = scmp.ne.s32.totalorder %s93, %s95
      %p99 = scmp.eq.s32.totalorder %s17, 0
      %p100 = por %p98, %p99
      %p101 = scmp.ne.s32.totalorder %s93, %s95
      %p102 = scmp.eq.s32.totalorder %s22, 1
      %p103 = por %p101, %p102
      %p104 = scmp.ne.s32.totalorder %s95, %s96
      %p105 = scmp.eq.s32.totalorder %s22, 0
      %p106 = por %p104, %p105
      %p107 = scmp.ne.s32.totalorder %s95, %s96
      %p108 = scmp.eq.s32.totalorder %s23, 1
      %p109 = por %p107, %p108
      %p111 = scmp.ne.s32.totalorder %s96, %s110
      %p112 = scmp.eq.s32.totalorder %s23, 0
      %p113 = por %p111, %p112
      %s115 = sadd.s32 %s114, 1
      %p118 = scmp.eq.s32.totalorder %s17, 1
      %p119 = scmp.ne.s32.totalorder %s114, %s116
      %p120 = scmp.eq.s32.totalorder %s17, 0
      %p121 = por %p119, %p120
      %p122 = scmp.ne.s32.totalorder %s114, %s116
      %p123 = scmp.eq.s32.totalorder %s22, 1
      %p124 = por %p122, %p123
      %p125 = scmp.ne.s32.totalorder %s116, %s117
      %p126 = scmp.eq.s32.totalorder %s22, 0
      %p127 = por %p125, %p126
      %p128 = scmp.ne.s32.totalorder %s116, %s117
      %p129 = scmp.eq.s32.totalorder %s23, 1
      %p130 = por %p128, %p129
      %p132 = scmp.ne.s32.totalorder %s117, %s131
      %p133 = scmp.eq.s32.totalorder %s23, 0
      %p134 = por %p132, %p133
      %s136 = sadd.s32 %s135, 1
      %p139 = scmp.eq.s32.totalorder %s17, 1
      %p140 = scmp.ne.s32.totalorder %s135, %s137
      %p141 = scmp.eq.s32.totalorder %s17, 0
      %p142 = por %p140, %p141
      %p143 = scmp.ne.s32.totalorder %s135, %s137
      %p144 = scmp.eq.s32.totalorder %s22, 1
      %p145 = por %p143, %p144
      %p146 = scmp.ne.s32.totalorder %s137, %s138
      %p147 = scmp.eq.s32.totalorder %s22, 0
      %p148 = por %p146, %p147
      %p149 = scmp.ne.s32.totalorder %s137, %s138
      %p150 = scmp.eq.s32.totalorder %s23, 1
      %p151 = por %p149, %p150
      %p153 = scmp.ne.s32.totalorder %s138, %s152
      %p154 = scmp.eq.s32.totalorder %s23, 0
      %p155 = por %p153, %p154
      %s157 = sadd.s32 %s156, 1
      %p160 = scmp.eq.s32.totalorder %s17, 1
      %p161 = scmp.ne.s32.totalorder %s156, %s158
      %p162 = scmp.eq.s32.totalorder %s17, 0
      %p163 = por %p161, %p162
      %p164 = scmp.ne.s32.totalorder %s156, %s158
      %p165 = scmp.eq.s32.totalorder %s22, 1
      %p166 = por %p164, %p165
      %p167 = scmp.ne.s32.totalorder %s158, %s159
      %p168 = scmp.eq.s32.totalorder %s22, 0
      %p169 = por %p167, %p168
      %p170 = scmp.ne.s32.totalorder %s158, %s159
      %p171 = scmp.eq.s32.totalorder %s23, 1
      %p172 = por %p170, %p171
      %p174 = scmp.ne.s32.totalorder %s159, %s173
      %p175 = scmp.eq.s32.totalorder %s23, 0
      %p176 = por %p174, %p175
      %s177 = ssub.s32 %s24, %s36
      %s178 = ssub.s32 %s25, %s32
      %s179 = sor.u32 %s177, %s178
      %p180 = scmp.eq.s32.totalorder %s179, 0
      %s182 = sadd.s32 %s181, 1
      %s183 = scalar_select %p180, %s181, %s182
      %p186 = pneg %p180
      %p187 = scmp.eq.s32.totalorder %s17, 1
      %p188 = por %p186, %p187
      %p189 = scmp.ne.s32.totalorder %s181, %s184
      %p190 = scmp.eq.s32.totalorder %s17, 0
      %p191 = por %p189, %p190
      %p192 = scmp.ne.s32.totalorder %s181, %s184
      %p193 = scmp.eq.s32.totalorder %s22, 1
      %p194 = por %p192, %p193
      %p195 = scmp.ne.s32.totalorder %s184, %s185
      %p196 = scmp.eq.s32.totalorder %s22, 0
      %p197 = por %p195, %p196
      %p198 = scmp.ne.s32.totalorder %s184, %s185
      %p199 = scmp.eq.s32.totalorder %s23, 1
      %p200 = por %p198, %p199
      %p202 = scmp.ne.s32.totalorder %s185, %s201
      %p203 = scmp.eq.s32.totalorder %s23, 0
      %p204 = por %p202, %p203
      %p205 = scmp.le.s32.totalorder 1, %s17
      %p206 = scmp.lt.s32.totalorder %s17, 3
      %p207 = pnand %p205, %p206
      %p208 = pneg %p207
      // Predicated region
      $region9: #{tpu_custom_call.1} parent=5 // pred_check
        _
      $region10: #{tpu_custom_call.1} parent=5 // pred_check_branch
        %210 = sbr.rel (%p207) target = $region12
      $region11: #{tpu_custom_call.1} parent=5 // pred_region
        %s211 = ssub.s32 %s17, 1
        // Predicated region
        $region13: #{tpu_custom_call.1} parent=11 // pred_check
          %p212 = pneg %p106
        $region14: #{tpu_custom_call.1} parent=11 // pred_check_branch
          %214 = sbr.rel (%p212) target = $region16
        $region15: #{tpu_custom_call.1} parent=11 // pred_region
          %s216 = ssub.s32 1024, 1024
          %217 = vsyncadd [#allocation3], %s216
          %s218 = sshll.u32 [#allocation2], 4
          %s219 = int_to_ptr.vmem [resolvable:$true] %s218
          %224 = dma.hbm_to_vmem [thread:$0]  %s2, 1024, %s219, [#allocation3], 64, 64, 4
        $region16: #{tpu_custom_call.1} parent=11 // pred_fallthru
          _
        // Predicated region
        $region17: #{tpu_custom_call.1} parent=11 // pred_check
          %p225 = pneg %p127
        $region18: #{tpu_custom_call.1} parent=11 // pred_check_branch
          %227 = sbr.rel (%p225) target = $region20
        $region19: #{tpu_custom_call.1} parent=11 // pred_region
          _
        $region20: #{tpu_custom_call.1} parent=11 // pred_fallthru
          _
        // Predicated region
        $region21: #{tpu_custom_call.1} parent=11 // pred_check
          %p228 = pneg %p148
        $region22: #{tpu_custom_call.1} parent=11 // pred_check_branch
          %230 = sbr.rel (%p228) target = $region24
        $region23: #{tpu_custom_call.1} parent=11 // pred_region
          %s232 = ssub.s32 1024, 1024
          %233 = vsyncadd [#allocation6], %s232
          %s234 = sshll.u32 [#allocation5], 4
          %s235 = int_to_ptr.vmem [resolvable:$true] %s234
          %240 = dma.hbm_to_vmem [thread:$0]  %s4, 1024, %s235, [#allocation6], 64, 64, 4
        $region24: #{tpu_custom_call.1} parent=11 // pred_fallthru
          _
        // Predicated region
        $region25: #{tpu_custom_call.1} parent=11 // pred_check
          %p241 = pneg %p169
        $region26: #{tpu_custom_call.1} parent=11 // pred_check_branch
          %243 = sbr.rel (%p241) target = $region28
        $region27: #{tpu_custom_call.1} parent=11 // pred_region
          _
        $region28: #{tpu_custom_call.1} parent=11 // pred_fallthru
          _
      $region12: #{tpu_custom_call.1} parent=5 // pred_fallthru
        _
      %p244 = scmp.lt.s32.totalorder %s17, 2
      // Predicated region
      $region29: #{tpu_custom_call.1} parent=5 // pred_check
        %p245 = pneg %p244
      $region30: #{tpu_custom_call.1} parent=5 // pred_check_branch
        %247 = sbr.rel (%p245) target = $region32
      $region31: #{tpu_custom_call.1} parent=5 // pred_region
        // Predicated region
        $region33: #{tpu_custom_call.1} parent=31 // pred_check
          %p248 = pneg %p51
        $region34: #{tpu_custom_call.1} parent=31 // pred_check_branch
          %250 = sbr.rel (%p248) target = $region36
        $region35: #{tpu_custom_call.1} parent=31 // pred_region
          %p251 = scmp.lt.s32.totalorder %s24, 1
          %s252 = scalar_select %p251, %s24, 1
          %p253 = scmp.lt.s32.totalorder %s25, 0
          %s254 = scalar_select %p253, %s25, 0
          %s255 = sadd.s32 %s254, %s252
          %s256 = smul.addr %s255, 8
          %s257 = scalar_lea.vmem %s0, %s256
        $region36: #{tpu_custom_call.1} parent=31 // pred_fallthru
          _
        // Predicated region
        $region37: #{tpu_custom_call.1} parent=31 // pred_check
          %p258 = pneg %p79
        $region38: #{tpu_custom_call.1} parent=31 // pred_check_branch
          %260 = sbr.rel (%p258) target = $region40
        $region39: #{tpu_custom_call.1} parent=31 // pred_region
          %p261 = scmp.lt.s32.totalorder %s24, 1
          %s262 = scalar_select %p261, %s24, 1
          %p263 = scmp.lt.s32.totalorder %s25, 0
          %s264 = scalar_select %p263, %s25, 0
          %s265 = sadd.s32 %s264, %s262
          %s266 = smul.addr %s265, 8
          %s267 = scalar_lea.vmem %s1, %s266
        $region40: #{tpu_custom_call.1} parent=31 // pred_fallthru
          _
      $region32: #{tpu_custom_call.1} parent=5 // pred_fallthru
        _
      %p268 = scmp.le.s32.totalorder 1, %s17
      %p269 = scmp.lt.s32.totalorder %s17, 3
      %p270 = pnand %p268, %p269
      %p271 = pneg %p270
      // Predicated region
      $region41: #{tpu_custom_call.1} parent=5 // pred_check
        _
      $region42: #{tpu_custom_call.1} parent=5 // pred_check_branch
        %273 = sbr.rel (%p270) target = $region44
      $region43: #{tpu_custom_call.1} parent=5 // pred_region
        %s274 = ssub.s32 %s17, 1
        // Predicated region
        $region45: #{tpu_custom_call.1} parent=43 // pred_check
          %p275 = pneg %p106
        $region46: #{tpu_custom_call.1} parent=43 // pred_check_branch
          %277 = sbr.rel (%p275) target = $region48
        $region47: #{tpu_custom_call.1} parent=43 // pred_region
          %278 = dma.done [#allocation3], 1024
        $region48: #{tpu_custom_call.1} parent=43 // pred_fallthru
          _
        // Predicated region
        $region49: #{tpu_custom_call.1} parent=43 // pred_check
          %p279 = pneg %p148
        $region50: #{tpu_custom_call.1} parent=43 // pred_check_branch
          %281 = sbr.rel (%p279) target = $region52
        $region51: #{tpu_custom_call.1} parent=43 // pred_region
          %282 = dma.done [#allocation6], 1024
        $region52: #{tpu_custom_call.1} parent=43 // pred_fallthru
          _
        %p283 = scmp.lt.s32.totalorder %s26, 1
        %s284 = scalar_select %p283, %s26, 1
        %p285 = scmp.lt.s32.totalorder %s27, 0
        %s286 = scalar_select %p285, %s27, 0
        %s287 = sadd.s32 %s286, %s284
        %s288 = smul.addr %s287, 8
        %s289 = scalar_lea.vmem %s0, %s288
        %p290 = pneg %p57
        %p291 = pneg %p54
        %p292 = scmp.lt.s32.totalorder %s26, 1
        %s293 = scalar_select %p292, %s26, 1
        %p294 = scmp.lt.s32.totalorder %s27, 0
        %s295 = scalar_select %p294, %s27, 0
        %s296 = sadd.s32 %s295, %s293
        %s297 = smul.addr %s296, 8
        %s298 = scalar_lea.vmem %s1, %s297
        %p299 = pneg %p85
        %p300 = pneg %p82
        %p301 = pneg %p106
        %p302 = pneg %p103
        %p303 = pneg %p127
        %p304 = pneg %p124
        %p305 = pneg %p148
        %p306 = pneg %p145
        %p307 = pneg %p169
        %p308 = pneg %p166
        %p309 = pneg %p197
        %p310 = pneg %p194
        %s311 = sand.u32 %s184, 1
        %s312 = scalar_lea.sflag [#allocation4], %s311
        %s313 = sand.u32 %s184, 1
        %s314 = smul.addr %s313, 8
        %s315 = scalar_lea.vmem [#allocation7], %s314
        %p316 = scmp.lt.s32.totalorder %s26, 1
        %s317 = scalar_select %p316, %s26, 1
        %p318 = scmp.lt.s32.totalorder %s27, 0
        %s319 = scalar_select %p318, %s27, 0
        %s320 = sadd.s32 %s319, %s317
        %s321 = smul.addr %s320, 8
        %s322 = scalar_lea.vmem %s0, %s321
        %p323 = scmp.lt.s32.totalorder %s26, 1
        %s324 = scalar_select %p323, %s26, 1
        %p325 = scmp.lt.s32.totalorder %s27, 0
        %s326 = scalar_select %p325, %s27, 0
        %s327 = sadd.s32 %s326, %s324
        %s328 = smul.addr %s327, 8
        %s329 = scalar_lea.vmem %s1, %s328
        %v331 = vld [vmem:[%s322] sm:$0xff]
        %v332 = vld [vmem:[%s329] sm:$0xff]
        %v333 = vpack.c.bf16 %v331, %v331
        %v334 = vld [vmem:[#allocation2] sm:$0xf]
        %v335 = vld [vmem:[#allocation2 + $0x4] sm:$0xf]
        %v336 = vld [vmem:[#allocation2 + $0x8] sm:$0xf]
        %v337 = vld [vmem:[#allocation2 + $0xc] sm:$0xf]
        %v338 = vld [vmem:[#allocation2 + $0x10] sm:$0xf]
        %v339 = vld [vmem:[#allocation2 + $0x14] sm:$0xf]
        %v340 = vld [vmem:[#allocation2 + $0x18] sm:$0xf]
        %v341 = vld [vmem:[#allocation2 + $0x1c] sm:$0xf]
        %v342 = vld [vmem:[#allocation2 + $0x20] sm:$0xf]
        %v343 = vld [vmem:[#allocation2 + $0x24] sm:$0xf]
        %v344 = vld [vmem:[#allocation2 + $0x28] sm:$0xf]
        %v345 = vld [vmem:[#allocation2 + $0x2c] sm:$0xf]
        %v346 = vld [vmem:[#allocation2 + $0x30] sm:$0xf]
        %v347 = vld [vmem:[#allocation2 + $0x34] sm:$0xf]
        %v348 = vld [vmem:[#allocation2 + $0x38] sm:$0xf]
        %v349 = vld [vmem:[#allocation2 + $0x3c] sm:$0xf]
        %v350 = vld [vmem:[%s3] sm:$0x1]
        %v352 = vlaneseq
        %v353 = vshrl.u32 %v352, 7
        %v354 = vsub.s32 0, %v353
        %v355 = vrot.slane %v350, %v354
        %v373 = vunpack.c.l.b16 %v334
        %v374 = vunpack.c.l.b16 %v335
        %v375 = vunpack.c.l.b16 %v336
        %v376 = vunpack.c.l.b16 %v337
        %v377 = vunpack.c.l.b16 %v338
        %v378 = vunpack.c.l.b16 %v339
        %v379 = vunpack.c.l.b16 %v340
        %v380 = vunpack.c.l.b16 %v341
        %v381 = vunpack.c.l.b16 %v342
        %v382 = vunpack.c.l.b16 %v343
        %v383 = vunpack.c.l.b16 %v344
        %v384 = vunpack.c.l.b16 %v345
        %v385 = vunpack.c.l.b16 %v346
        %v386 = vunpack.c.l.b16 %v347
        %v387 = vunpack.c.l.b16 %v348
        %v388 = vunpack.c.l.b16 %v349
        %v389 = vpack.c.b16 %v374, %v373
        %v390 = vpack.c.b16 %v376, %v375
        %v391 = vpack.c.b16 %v378, %v377
        %v392 = vpack.c.b16 %v380, %v379
        %v393 = vpack.c.b16 %v382, %v381
        %v394 = vpack.c.b16 %v384, %v383
        %v395 = vpack.c.b16 %v386, %v385
        %v396 = vpack.c.b16 %v388, %v387
        %405 = vmatprep.subr.bf16.mxu0 0
        %406 = vmatpush1.bf16.msra.mxu0 %v396
        %407 = vmatprep.subr.bf16.mxu0 0
        %408 = vmatpush1.bf16.msra.mxu0 %v395
        %409 = vmatprep.subr.bf16.mxu0 0
        %410 = vmatpush1.bf16.msra.mxu0 %v394
        %411 = vmatprep.subr.bf16.mxu0 0
        %412 = vmatpush1.bf16.msra.mxu0 %v393
        %413 = vmatprep.subr.bf16.mxu0 0
        %414 = vmatpush1.bf16.msra.mxu0 %v392
        %415 = vmatprep.subr.bf16.mxu0 0
        %416 = vmatpush1.bf16.msra.mxu0 %v391
        %417 = vmatprep.subr.bf16.mxu0 0
        %418 = vmatpush1.bf16.msra.mxu0 %v390
        %419 = vmatprep.subr.bf16.mxu0 0
        %420 = vmatpush1.bf16.msra.mxu0 %v389
        %421 = vmatprep.subr.bf16.mxu0 0
        %422 = vmatpush2.bf16.msra.mxu0 0
        %423 = vmatprep.subr.bf16.mxu0 0
        %424 = vmatpush2.bf16.msra.mxu0 0
        %425 = vmatprep.subr.bf16.mxu0 0
        %426 = vmatpush2.bf16.msra.mxu0 0
        %427 = vmatprep.subr.bf16.mxu0 0
        %428 = vmatpush2.bf16.msra.mxu0 0
        %429 = vmatprep.subr.bf16.mxu0 0
        %430 = vmatpush2.bf16.msra.mxu0 0
        %431 = vmatprep.subr.bf16.mxu0 0
        %432 = vmatpush2.bf16.msra.mxu0 0
        %433 = vmatprep.subr.bf16.mxu0 0
        %434 = vmatpush2.bf16.msra.mxu0 0
        %435 = vmatprep.subr.bf16.mxu0 0
        %436 = vmatpush2.bf16.msra.mxu0 0
        %437 = vmatprep.mubr.bf16.mxu0 0
        %438 = vmatmul.mubr.bf16.gmra.mxu0 %v333
        %v439 = vpop.f32.mrf.mxu0
        %v440 = vadd.f32 %v355, %v439
        %v441 = vpop.f32.mrf.mxu0
        %v442 = vpop.f32.mrf.mxu0
        %v443 = vpop.f32.mrf.mxu0
        %444 = vdwg.mxu0
        %v445 = vmul.f32 %v440, %v440
        %v446 = vmul.f32 %v440, %v445
        %v447 = vmul.f32 %v446, 0.044715
        %v448 = vadd.f32 %v440, %v447
        %v449 = vmul.f32 %v448, 0.7978846
        %v450 = vtanh.pop %v449
        %v451 = vadd.f32 %v450, 1.0
        %v452 = vmul.f32 %v451, 0.5
        %v453 = vmul.f32 %v440, %v452
        %v454 = vpack.c.bf16 %v453, %v453
        %v455 = vld [vmem:[#allocation5] sm:$0xf]
        %v456 = vld [vmem:[#allocation5 + $0x4] sm:$0xf]
        %v457 = vld [vmem:[#allocation5 + $0x8] sm:$0xf]
        %v458 = vld [vmem:[#allocation5 + $0xc] sm:$0xf]
        %v459 = vld [vmem:[#allocation5 + $0x10] sm:$0xf]
        %v460 = vld [vmem:[#allocation5 + $0x14] sm:$0xf]
        %v461 = vld [vmem:[#allocation5 + $0x18] sm:$0xf]
        %v462 = vld [vmem:[#allocation5 + $0x1c] sm:$0xf]
        %v463 = vld [vmem:[#allocation5 + $0x20] sm:$0xf]
        %v464 = vld [vmem:[#allocation5 + $0x24] sm:$0xf]
        %v465 = vld [vmem:[#allocation5 + $0x28] sm:$0xf]
        %v466 = vld [vmem:[#allocation5 + $0x2c] sm:$0xf]
        %v467 = vld [vmem:[#allocation5 + $0x30] sm:$0xf]
        %v468 = vld [vmem:[#allocation5 + $0x34] sm:$0xf]
        %v469 = vld [vmem:[#allocation5 + $0x38] sm:$0xf]
        %v470 = vld [vmem:[#allocation5 + $0x3c] sm:$0xf]
        %v471 = vld [vmem:[%s5] sm:$0x1]
        %v473 = vlaneseq
        %v474 = vshrl.u32 %v473, 7
        %v475 = vsub.s32 0, %v474
        %v476 = vrot.slane %v471, %v475
        %v494 = vunpack.c.l.b16 %v455
        %v495 = vunpack.c.l.b16 %v456
        %v496 = vunpack.c.l.b16 %v457
        %v497 = vunpack.c.l.b16 %v458
        %v498 = vunpack.c.l.b16 %v459
        %v499 = vunpack.c.l.b16 %v460
        %v500 = vunpack.c.l.b16 %v461
        %v501 = vunpack.c.l.b16 %v462
        %v502 = vunpack.c.l.b16 %v463
        %v503 = vunpack.c.l.b16 %v464
        %v504 = vunpack.c.l.b16 %v465
        %v505 = vunpack.c.l.b16 %v466
        %v506 = vunpack.c.l.b16 %v467
        %v507 = vunpack.c.l.b16 %v468
        %v508 = vunpack.c.l.b16 %v469
        %v509 = vunpack.c.l.b16 %v470
        %v510 = vpack.c.b16 %v495, %v494
        %v511 = vpack.c.b16 %v497, %v496
        %v512 = vpack.c.b16 %v499, %v498
        %v513 = vpack.c.b16 %v501, %v500
        %v514 = vpack.c.b16 %v503, %v502
        %v515 = vpack.c.b16 %v505, %v504
        %v516 = vpack.c.b16 %v507, %v506
        %v517 = vpack.c.b16 %v509, %v508
        %526 = vmatprep.subr.bf16.mxu0 0
        %527 = vmatpush1.bf16.msra.mxu0 %v517
        %528 = vmatprep.subr.bf16.mxu0 0
        %529 = vmatpush1.bf16.msra.mxu0 %v516
        %530 = vmatprep.subr.bf16.mxu0 0
        %531 = vmatpush1.bf16.msra.mxu0 %v515
        %532 = vmatprep.subr.bf16.mxu0 0
        %533 = vmatpush1.bf16.msra.mxu0 %v514
        %534 = vmatprep.subr.bf16.mxu0 0
        %535 = vmatpush1.bf16.msra.mxu0 %v513
        %536 = vmatprep.subr.bf16.mxu0 0
        %537 = vmatpush1.bf16.msra.mxu0 %v512
        %538 = vmatprep.subr.bf16.mxu0 0
        %539 = vmatpush1.bf16.msra.mxu0 %v511
        %540 = vmatprep.subr.bf16.mxu0 0
        %541 = vmatpush1.bf16.msra.mxu0 %v510
        %542 = vmatprep.subr.bf16.mxu0 0
        %543 = vmatpush2.bf16.msra.mxu0 0
        %544 = vmatprep.subr.bf16.mxu0 0
        %545 = vmatpush2.bf16.msra.mxu0 0
        %546 = vmatprep.subr.bf16.mxu0 0
        %547 = vmatpush2.bf16.msra.mxu0 0
        %548 = vmatprep.subr.bf16.mxu0 0
        %549 = vmatpush2.bf16.msra.mxu0 0
        %550 = vmatprep.subr.bf16.mxu0 0
        %551 = vmatpush2.bf16.msra.mxu0 0
        %552 = vmatprep.subr.bf16.mxu0 0
        %553 = vmatpush2.bf16.msra.mxu0 0
        %554 = vmatprep.subr.bf16.mxu0 0
        %555 = vmatpush2.bf16.msra.mxu0 0
        %556 = vmatprep.subr.bf16.mxu0 0
        %557 = vmatpush2.bf16.msra.mxu0 0
        %558 = vmatprep.mubr.bf16.mxu0 0
        %559 = vmatmul.mubr.bf16.gmra.mxu0 %v454
        %v560 = vpop.f32.mrf.mxu0
        %v561 = vadd.f32 %v476, %v560
        %v562 = vpop.f32.mrf.mxu0
        %v563 = vpop.f32.mrf.mxu0
        %v564 = vpop.f32.mrf.mxu0
        %565 = vdwg.mxu0
        %567 = vset.pattern.permute.xlu0 0
        %568 = vperm.xlu0 %567, %v332
        %v569 = vpop.permute.xlu0 %568
        %v571 = vmul.f32 %v569, %v561
        %572 = vst [vmem:[%s315] sm:$0xff] %v571
        %s573 = sand.u32 %s184, 1
        %s574 = scalar_lea.sflag [#allocation4], %s573
        %s575 = sand.u32 %s184, 1
        %s576 = smul.addr %s575, 8
        %s577 = scalar_lea.vmem [#allocation7], %s576
        // Predicated region
        $region53: #{tpu_custom_call.1} parent=43 // pred_check
          %p578 = pneg %p194
        $region54: #{tpu_custom_call.1} parent=43 // pred_check_branch
          %580 = sbr.rel (%p578) target = $region56
        $region55: #{tpu_custom_call.1} parent=43 // pred_region
          %s582 = ssub.s32 128, 128
          %583 = vsyncadd %s574, %s582
          %s584 = sadd.s32 %s27, %s26
          %s585 = smul.addr %s584, 128
          %s586 = scalar_lea.hbm %s6, %s585
          %s588 = sshll.u32 %s577, 4
          %s589 = int_to_ptr.vmem [resolvable:$true] %s588
          %591 = dma.vmem_to_hbm [thread:$0]  %s589, 128, %s586, %s574
        $region56: #{tpu_custom_call.1} parent=43 // pred_fallthru
          _
      $region44: #{tpu_custom_call.1} parent=5 // pred_fallthru
        _
      %p592 = scmp.le.s32.totalorder 2, %s17
      // Predicated region
      $region57: #{tpu_custom_call.1} parent=5 // pred_check
        %p593 = pneg %p592
      $region58: #{tpu_custom_call.1} parent=5 // pred_check_branch
        %595 = sbr.rel (%p593) target = $region60
      $region59: #{tpu_custom_call.1} parent=5 // pred_region
        %s596 = ssub.s32 %s17, 2
        // Predicated region
        $region61: #{tpu_custom_call.1} parent=59 // pred_check
          %p597 = pneg %p200
        $region62: #{tpu_custom_call.1} parent=59 // pred_check_branch
          %599 = sbr.rel (%p597) target = $region64
        $region63: #{tpu_custom_call.1} parent=59 // pred_region
          %s600 = sand.u32 %s185, 1
          %s601 = scalar_lea.sflag [#allocation4], %s600
          %s602 = sand.u32 %s185, 1
          %s603 = smul.addr %s602, 8
          %s604 = scalar_lea.vmem [#allocation7], %s603
          %605 = dma.done %s601, 128
        $region64: #{tpu_custom_call.1} parent=59 // pred_fallthru
          _
      $region60: #{tpu_custom_call.1} parent=5 // pred_fallthru
        _
    $region6: #{tpu_custom_call.1} parent=1 // loop_footer
      %s21 = sadd.s32 1, %s17
    $region7: #{tpu_custom_call.1} parent=1 // loop_footer_branch
      %16 = sbr.rel target = $region3
    $region8: #{tpu_custom_call.1} parent=1 // loop_exit
      _
    %606 = vsyncpa [#allocation3], 1
    %s607 = scalar_lea.sflag [#allocation3], 1
    %608 = vsyncpa %s607, 1
    %609 = vsyncpa [#allocation6], 1
    %610 = vsyncpa [#allocation4], 1
    %s611 = scalar_lea.sflag [#allocation4], 1
    %612 = vsyncpa %s611, 1

// kernel: tpu_custom_call.1
$region0: #{tpu_custom_call.1}
  #allocation0 [shape = 'u32[]', space=smem, size = 0x4, offset = 0x4, fixed_abs, tag = 'smem constant byte address 0x4 - core index']
  #allocation1 [shape = 'u32[144,128]{1,0:T(1,128)}', space=vmem, size = 0x12000, scoped, tag = 'internal scratch']
  %s0 = inlined_call_operand.vmem [shape: f32[2,8,128], index: 0, kind: input, shape index: {}]
  %s1 = inlined_call_operand.vmem [shape: f32[2,8,1], index: 1, kind: input, shape index: {}]
  %s2 = inlined_call_operand.hbm [shape: bf16[128,128], index: 2, kind: input, shape index: {}]
  %s3 = inlined_call_operand.vmem [shape: f32[1,128], index: 3, kind: input, shape index: {}]
  %s4 = inlined_call_operand.hbm [shape: bf16[128,128], index: 4, kind: input, shape index: {}]
  %s5 = inlined_call_operand.vmem [shape: f32[1,128], index: 5, kind: input, shape index: {}]
  %s6 = inlined_call_operand.hbm [shape: f32[2,8,128], index: 6, kind: output, shape index: {}]
  %s7 = sld [smem:[#allocation0]]
  $region65: #{tpu_custom_call.1} parent=0
    _
  %s9 = ssub.s32 1, %s7
  %s10 = scalar_select 0, %s9, %s7
  $region1: #{tpu_custom_call.1} parent=0
    #allocation2 [shape = 'u8[32768]{0}', space=vmem, size = 0x8000, scoped, tag = 'input window, operand 2, single buffered']
    #allocation3 [shape = 's32[2]{0}', space=sflag, size = 0x8, scoped, tag = 'scoped memory for tpu_custom_call.1']
    #allocation4 [shape = 's32[2]{0}', space=sflag, size = 0x8, scoped, tag = 'scoped memory for tpu_custom_call.1']
    #allocation5 [shape = 'u8[32768]{0}', space=vmem, size = 0x8000, scoped, tag = 'input window, operand 4, single buffered']
    #allocation6 [shape = 's32[1]{0}', space=sflag, size = 0x4, scoped, tag = 'scoped memory for tpu_custom_call.1']
    #allocation7 [shape = 'u8[8192]{0}', space=vmem, size = 0x2000, scoped, tag = 'output window, operand 0']
    %11 = vsyncpa [#allocation3], 0
    %12 = vsyncpa [#allocation6], 0
    %13 = vsyncpa [#allocation4], 0
    %s14 = scalar_lea.sflag [#allocation4], 1
    %15 = vsyncpa %s14, 0
    loop: start=0, step=1, limit=4
    $region2: #{tpu_custom_call.1} parent=1 // loop_pre_header
      _
    $region3: #{tpu_custom_call.1} parent=1 // loop_header
      %s17 = sphi 0, %s21
      %p18 = scmp.ge.s32.totalorder %s17, 4
      %s24 = sphi 0, %s36
      %s25 = sphi 0, %s32
      %s26 = sphi 0, %s24
      %s27 = sphi 0, %s25
      %s28 = sphi 0, %s26
      %s29 = sphi 0, %s27
      %s41 = sphi 0, %s43
      %s44 = sphi 0, %s41
      %s45 = sphi 0, %s44
      %s61 = sphi 0, %s45
      %s69 = sphi 0, %s71
      %s72 = sphi 0, %s69
      %s73 = sphi 0, %s72
      %s89 = sphi 0, %s73
      %s93 = sphi 0, %s93
      %s95 = sphi 0, %s93
      %s96 = sphi 0, %s95
      %s110 = sphi 0, %s96
      %s114 = sphi 0, %s114
      %s116 = sphi 0, %s114
      %s117 = sphi 0, %s116
      %s131 = sphi 0, %s117
      %s135 = sphi 0, %s135
      %s137 = sphi 0, %s135
      %s138 = sphi 0, %s137
      %s152 = sphi 0, %s138
      %s156 = sphi 0, %s156
      %s158 = sphi 0, %s156
      %s159 = sphi 0, %s158
      %s173 = sphi 0, %s159
      %s181 = sphi 0, %s183
      %s184 = sphi 0, %s181
      %s185 = sphi 0, %s184
      %s201 = sphi 0, %s185
    $region4: #{tpu_custom_call.1} parent=1 // loop_header_branch
      %20 = sbr.rel (%p18) target = $region8
    $region5: #{tpu_custom_call.1} parent=1 // loop_body
      %s22 = ssub.s32 %s17, 1
      %s23 = ssub.s32 %s17, 2
      %s30 = sadd.s32 1, %s25
      %p31 = scmp.ge.s32.totalorder %s30, 1
      %s32 = scalar_select %p31, 0, %s30
      %s33 = sadd.s32 1, %s24
      %s34 = scalar_select %p31, %s33, %s24
      %p35 = scmp.ge.s32.totalorder %s34, 2
      %s36 = scalar_select %p35, 0, %s34
      %s37 = ssub.s32 %s24, %s36
      %s38 = ssub.s32 %s25, %s32
      %s39 = sor.u32 %s37, %s38
      %p40 = scmp.eq.s32.totalorder %s39, 0
      %s42 = sadd.s32 %s41, 1
      %s43 = scalar_select %p40, %s41, %s42
      %p46 = pneg %p40
      %p47 = scmp.eq.s32.totalorder %s17, 1
      %p48 = por %p46, %p47
      %p49 = scmp.ne.s32.totalorder %s41, %s44
      %p50 = scmp.eq.s32.totalorder %s17, 0
      %p51 = por %p49, %p50
      %p52 = scmp.ne.s32.totalorder %s41, %s44
      %p53 = scmp.eq.s32.totalorder %s22, 1
      %p54 = por %p52, %p53
      %p55 = scmp.ne.s32.totalorder %s44, %s45
      %p56 = scmp.eq.s32.totalorder %s22, 0
      %p57 = por %p55, %p56
      %p58 = scmp.ne.s32.totalorder %s44, %s45
      %p59 = scmp.eq.s32.totalorder %s23, 1
      %p60 = por %p58, %p59
      %p62 = scmp.ne.s32.totalorder %s45, %s61
      %p63 = scmp.eq.s32.totalorder %s23, 0
      %p64 = por %p62, %p63
      %s65 = ssub.s32 %s24, %s36
      %s66 = ssub.s32 %s25, %s32
      %s67 = sor.u32 %s65, %s66
      %p68 = scmp.eq.s32.totalorder %s67, 0
      %s70 = sadd.s32 %s69, 1
      %s71 = scalar_select %p68, %s69, %s70
      %p74 = pneg %p68
      %p75 = scmp.eq.s32.totalorder %s17, 1
      %p76 = por %p74, %p75
      %p77 = scmp.ne.s32.totalorder %s69, %s72
      %p78 = scmp.eq.s32.totalorder %s17, 0
      %p79 = por %p77, %p78
      %p80 = scmp.ne.s32.totalorder %s69, %s72
      %p81 = scmp.eq.s32.totalorder %s22, 1
      %p82 = por %p80, %p81
      %p83 = scmp.ne.s32.totalorder %s72, %s73
      %p84 = scmp.eq.s32.totalorder %s22, 0
      %p85 = por %p83, %p84
      %p86 = scmp.ne.s32.totalorder %s72, %s73
      %p87 = scmp.eq.s32.totalorder %s23, 1
      %p88 = por %p86, %p87
      %p90 = scmp.ne.s32.totalorder %s73, %s89
      %p91 = scmp.eq.s32.totalorder %s23, 0
      %p92 = por %p90, %p91
      %s94 = sadd.s32 %s93, 1
      %p97 = scmp.eq.s32.totalorder %s17, 1
      %p98 = scmp.ne.s32.totalorder %s93, %s95
      %p99 = scmp.eq.s32.totalorder %s17, 0
      %p100 = por %p98, %p99
      %p101 = scmp.ne.s32.totalorder %s93, %s95
      %p102 = scmp.eq.s32.totalorder %s22, 1
      %p103 = por %p101, %p102
      %p104 = scmp.ne.s32.totalorder %s95, %s96
      %p105 = scmp.eq.s32.totalorder %s22, 0
      %p106 = por %p104, %p105
      %p107 = scmp.ne.s32.totalorder %s95, %s96
      %p108 = scmp.eq.s32.totalorder %s23, 1
      %p109 = por %p107, %p108
      %p111 = scmp.ne.s32.totalorder %s96, %s110
      %p112 = scmp.eq.s32.totalorder %s23, 0
      %p113 = por %p111, %p112
      %s115 = sadd.s32 %s114, 1
      %p118 = scmp.eq.s32.totalorder %s17, 1
      %p119 = scmp.ne.s32.totalorder %s114, %s116
      %p120 = scmp.eq.s32.totalorder %s17, 0
      %p121 = por %p119, %p120
      %p122 = scmp.ne.s32.totalorder %s114, %s116
      %p123 = scmp.eq.s32.totalorder %s22, 1
      %p124 = por %p122, %p123
      %p125 = scmp.ne.s32.totalorder %s116, %s117
      %p126 = scmp.eq.s32.totalorder %s22, 0
      %p127 = por %p125, %p126
      %p128 = scmp.ne.s32.totalorder %s116, %s117
      %p129 = scmp.eq.s32.totalorder %s23, 1
      %p130 = por %p128, %p129
      %p132 = scmp.ne.s32.totalorder %s117, %s131
      %p133 = scmp.eq.s32.totalorder %s23, 0
      %p134 = por %p132, %p133
      %s136 = sadd.s32 %s135, 1
      %p139 = scmp.eq.s32.totalorder %s17, 1
      %p140 = scmp.ne.s32.totalorder %s135, %s137
      %p141 = scmp.eq.s32.totalorder %s17, 0
      %p142 = por %p140, %p141
      %p143 = scmp.ne.s32.totalorder %s135, %s137
      %p144 = scmp.eq.s32.totalorder %s22, 1
      %p145 = por %p143, %p144
      %p146 = scmp.ne.s32.totalorder %s137, %s138
      %p147 = scmp.eq.s32.totalorder %s22, 0
      %p148 = por %p146, %p147
      %p149 = scmp.ne.s32.totalorder %s137, %s138
      %p150 = scmp.eq.s32.totalorder %s23, 1
      %p151 = por %p149, %p150
      %p153 = scmp.ne.s32.totalorder %s138, %s152
      %p154 = scmp.eq.s32.totalorder %s23, 0
      %p155 = por %p153, %p154
      %s157 = sadd.s32 %s156, 1
      %p160 = scmp.eq.s32.totalorder %s17, 1
      %p161 = scmp.ne.s32.totalorder %s156, %s158
      %p162 = scmp.eq.s32.totalorder %s17, 0
      %p163 = por %p161, %p162
      %p164 = scmp.ne.s32.totalorder %s156, %s158
      %p165 = scmp.eq.s32.totalorder %s22, 1
      %p166 = por %p164, %p165
      %p167 = scmp.ne.s32.totalorder %s158, %s159
      %p168 = scmp.eq.s32.totalorder %s22, 0
      %p169 = por %p167, %p168
      %p170 = scmp.ne.s32.totalorder %s158, %s159
      %p171 = scmp.eq.s32.totalorder %s23, 1
      %p172 = por %p170, %p171
      %p174 = scmp.ne.s32.totalorder %s159, %s173
      %p175 = scmp.eq.s32.totalorder %s23, 0
      %p176 = por %p174, %p175
      %s177 = ssub.s32 %s24, %s36
      %s178 = ssub.s32 %s25, %s32
      %s179 = sor.u32 %s177, %s178
      %p180 = scmp.eq.s32.totalorder %s179, 0
      %s182 = sadd.s32 %s181, 1
      %s183 = scalar_select %p180, %s181, %s182
      %p186 = pneg %p180
      %p187 = scmp.eq.s32.totalorder %s17, 1
      %p188 = por %p186, %p187
      %p189 = scmp.ne.s32.totalorder %s181, %s184
      %p190 = scmp.eq.s32.totalorder %s17, 0
      %p191 = por %p189, %p190
      %p192 = scmp.ne.s32.totalorder %s181, %s184
      %p193 = scmp.eq.s32.totalorder %s22, 1
      %p194 = por %p192, %p193
      %p195 = scmp.ne.s32.totalorder %s184, %s185
      %p196 = scmp.eq.s32.totalorder %s22, 0
      %p197 = por %p195, %p196
      %p198 = scmp.ne.s32.totalorder %s184, %s185
      %p199 = scmp.eq.s32.totalorder %s23, 1
      %p200 = por %p198, %p199
      %p202 = scmp.ne.s32.totalorder %s185, %s201
      %p203 = scmp.eq.s32.totalorder %s23, 0
      %p204 = por %p202, %p203
      %p205 = scmp.le.s32.totalorder 1, %s17
      %p206 = scmp.lt.s32.totalorder %s17, 3
      %p207 = pnand %p205, %p206
      %p208 = pneg %p207
      // Predicated region
      $region9: #{tpu_custom_call.1} parent=5 // pred_check
        _
      $region10: #{tpu_custom_call.1} parent=5 // pred_check_branch
        %210 = sbr.rel (%p207) target = $region12
      $region11: #{tpu_custom_call.1} parent=5 // pred_region
        %s211 = ssub.s32 %s17, 1
        // Predicated region
        $region13: #{tpu_custom_call.1} parent=11 // pred_check
          %p212 = pneg %p106
        $region14: #{tpu_custom_call.1} parent=11 // pred_check_branch
          %214 = sbr.rel (%p212) target = $region16
        $region15: #{tpu_custom_call.1} parent=11 // pred_region
          %s216 = ssub.s32 1024, 1024
          %217 = vsyncadd [#allocation3], %s216
          %s218 = sshll.u32 [#allocation2], 4
          %s219 = int_to_ptr.vmem [resolvable:$true] %s218
          %224 = dma.hbm_to_vmem [thread:$0]  %s2, 1024, %s219, [#allocation3], 64, 64, 4
        $region16: #{tpu_custom_call.1} parent=11 // pred_fallthru
          _
        // Predicated region
        $region17: #{tpu_custom_call.1} parent=11 // pred_check
          %p225 = pneg %p127
        $region18: #{tpu_custom_call.1} parent=11 // pred_check_branch
          %227 = sbr.rel (%p225) target = $region20
        $region19: #{tpu_custom_call.1} parent=11 // pred_region
          _
        $region20: #{tpu_custom_call.1} parent=11 // pred_fallthru
          _
        // Predicated region
        $region21: #{tpu_custom_call.1} parent=11 // pred_check
          %p228 = pneg %p148
        $region22: #{tpu_custom_call.1} parent=11 // pred_check_branch
          %230 = sbr.rel (%p228) target = $region24
        $region23: #{tpu_custom_call.1} parent=11 // pred_region
          %s232 = ssub.s32 1024, 1024
          %233 = vsyncadd [#allocation6], %s232
          %s234 = sshll.u32 [#allocation5], 4
          %s235 = int_to_ptr.vmem [resolvable:$true] %s234
          %240 = dma.hbm_to_vmem [thread:$0]  %s4, 1024, %s235, [#allocation6], 64, 64, 4
        $region24: #{tpu_custom_call.1} parent=11 // pred_fallthru
          _
        // Predicated region
        $region25: #{tpu_custom_call.1} parent=11 // pred_check
          %p241 = pneg %p169
        $region26: #{tpu_custom_call.1} parent=11 // pred_check_branch
          %243 = sbr.rel (%p241) target = $region28
        $region27: #{tpu_custom_call.1} parent=11 // pred_region
          _
        $region28: #{tpu_custom_call.1} parent=11 // pred_fallthru
          _
      $region12: #{tpu_custom_call.1} parent=5 // pred_fallthru
        _
      %p244 = scmp.lt.s32.totalorder %s17, 2
      // Predicated region
      $region29: #{tpu_custom_call.1} parent=5 // pred_check
        %p245 = pneg %p244
      $region30: #{tpu_custom_call.1} parent=5 // pred_check_branch
        %247 = sbr.rel (%p245) target = $region32
      $region31: #{tpu_custom_call.1} parent=5 // pred_region
        // Predicated region
        $region33: #{tpu_custom_call.1} parent=31 // pred_check
          %p248 = pneg %p51
        $region34: #{tpu_custom_call.1} parent=31 // pred_check_branch
          %250 = sbr.rel (%p248) target = $region36
        $region35: #{tpu_custom_call.1} parent=31 // pred_region
          %p251 = scmp.lt.s32.totalorder %s24, 1
          %s252 = scalar_select %p251, %s24, 1
          %p253 = scmp.lt.s32.totalorder %s25, 0
          %s254 = scalar_select %p253, %s25, 0
          %s255 = sadd.s32 %s254, %s252
          %s256 = smul.addr %s255, 8
          %s257 = scalar_lea.vmem %s0, %s256
        $region36: #{tpu_custom_call.1} parent=31 // pred_fallthru
          _
        // Predicated region
        $region37: #{tpu_custom_call.1} parent=31 // pred_check
          %p258 = pneg %p79
        $region38: #{tpu_custom_call.1} parent=31 // pred_check_branch
          %260 = sbr.rel (%p258) target = $region40
        $region39: #{tpu_custom_call.1} parent=31 // pred_region
          %p261 = scmp.lt.s32.totalorder %s24, 1
          %s262 = scalar_select %p261, %s24, 1
          %p263 = scmp.lt.s32.totalorder %s25, 0
          %s264 = scalar_select %p263, %s25, 0
          %s265 = sadd.s32 %s264, %s262
          %s266 = smul.addr %s265, 8
          %s267 = scalar_lea.vmem %s1, %s266
        $region40: #{tpu_custom_call.1} parent=31 // pred_fallthru
          _
      $region32: #{tpu_custom_call.1} parent=5 // pred_fallthru
        _
      %p268 = scmp.le.s32.totalorder 1, %s17
      %p269 = scmp.lt.s32.totalorder %s17, 3
      %p270 = pnand %p268, %p269
      %p271 = pneg %p270
      // Predicated region
      $region41: #{tpu_custom_call.1} parent=5 // pred_check
        _
      $region42: #{tpu_custom_call.1} parent=5 // pred_check_branch
        %273 = sbr.rel (%p270) target = $region44
      $region43: #{tpu_custom_call.1} parent=5 // pred_region
        %s274 = ssub.s32 %s17, 1
        // Predicated region
        $region45: #{tpu_custom_call.1} parent=43 // pred_check
          %p275 = pneg %p106
        $region46: #{tpu_custom_call.1} parent=43 // pred_check_branch
          %277 = sbr.rel (%p275) target = $region48
        $region47: #{tpu_custom_call.1} parent=43 // pred_region
          %278 = dma.done [#allocation3], 1024
        $region48: #{tpu_custom_call.1} parent=43 // pred_fallthru
          _
        // Predicated region
        $region49: #{tpu_custom_call.1} parent=43 // pred_check
          %p279 = pneg %p148
        $region50: #{tpu_custom_call.1} parent=43 // pred_check_branch
          %281 = sbr.rel (%p279) target = $region52
        $region51: #{tpu_custom_call.1} parent=43 // pred_region
          %282 = dma.done [#allocation6], 1024
        $region52: #{tpu_custom_call.1} parent=43 // pred_fallthru
          _
        %p283 = scmp.lt.s32.totalorder %s26, 1
        %s284 = scalar_select %p283, %s26, 1
        %p285 = scmp.lt.s32.totalorder %s27, 0
        %s286 = scalar_select %p285, %s27, 0
        %s287 = sadd.s32 %s286, %s284
        %s288 = smul.addr %s287, 8
        %s289 = scalar_lea.vmem %s0, %s288
        %p290 = pneg %p57
        %p291 = pneg %p54
        %p292 = scmp.lt.s32.totalorder %s26, 1
        %s293 = scalar_select %p292, %s26, 1
        %p294 = scmp.lt.s32.totalorder %s27, 0
        %s295 = scalar_select %p294, %s27, 0
        %s296 = sadd.s32 %s295, %s293
        %s297 = smul.addr %s296, 8
        %s298 = scalar_lea.vmem %s1, %s297
        %p299 = pneg %p85
        %p300 = pneg %p82
        %p301 = pneg %p106
        %p302 = pneg %p103
        %p303 = pneg %p127
        %p304 = pneg %p124
        %p305 = pneg %p148
        %p306 = pneg %p145
        %p307 = pneg %p169
        %p308 = pneg %p166
        %p309 = pneg %p197
        %p310 = pneg %p194
        %s311 = sand.u32 %s184, 1
        %s312 = scalar_lea.sflag [#allocation4], %s311
        %s313 = sand.u32 %s184, 1
        %s314 = smul.addr %s313, 8
        %s315 = scalar_lea.vmem [#allocation7], %s314
        %p316 = scmp.lt.s32.totalorder %s26, 1
        %s317 = scalar_select %p316, %s26, 1
        %p318 = scmp.lt.s32.totalorder %s27, 0
        %s319 = scalar_select %p318, %s27, 0
        %s320 = sadd.s32 %s319, %s317
        %s321 = smul.addr %s320, 8
        %s322 = scalar_lea.vmem %s0, %s321
        %p323 = scmp.lt.s32.totalorder %s26, 1
        %s324 = scalar_select %p323, %s26, 1
        %p325 = scmp.lt.s32.totalorder %s27, 0
        %s326 = scalar_select %p325, %s27, 0
        %s327 = sadd.s32 %s326, %s324
        %s328 = smul.addr %s327, 8
        %s329 = scalar_lea.vmem %s1, %s328
        %v331 = vld [vmem:[%s322] sm:$0xff]
        %v332 = vld [vmem:[%s329] sm:$0xff]
        %v333 = vpack.c.bf16 %v331, %v331
        %v334 = vld [vmem:[#allocation2] sm:$0xf]
        %v335 = vld [vmem:[#allocation2 + $0x4] sm:$0xf]
        %v336 = vld [vmem:[#allocation2 + $0x8] sm:$0xf]
        %v337 = vld [vmem:[#allocation2 + $0xc] sm:$0xf]
        %v338 = vld [vmem:[#allocation2 + $0x10] sm:$0xf]
        %v339 = vld [vmem:[#allocation2 + $0x14] sm:$0xf]
        %v340 = vld [vmem:[#allocation2 + $0x18] sm:$0xf]
        %v341 = vld [vmem:[#allocation2 + $0x1c] sm:$0xf]
        %v342 = vld [vmem:[#allocation2 + $0x20] sm:$0xf]
        %v343 = vld [vmem:[#allocation2 + $0x24] sm:$0xf]
        %v344 = vld [vmem:[#allocation2 + $0x28] sm:$0xf]
        %v345 = vld [vmem:[#allocation2 + $0x2c] sm:$0xf]
        %v346 = vld [vmem:[#allocation2 + $0x30] sm:$0xf]
        %v347 = vld [vmem:[#allocation2 + $0x34] sm:$0xf]
        %v348 = vld [vmem:[#allocation2 + $0x38] sm:$0xf]
        %v349 = vld [vmem:[#allocation2 + $0x3c] sm:$0xf]
        %v350 = vld [vmem:[%s3] sm:$0x1]
        %v352 = vlaneseq
        %v353 = vshrl.u32 %v352, 7
        %v354 = vsub.s32 0, %v353
        %v355 = vrot.slane %v350, %v354
        %v373 = vunpack.c.l.b16 %v334
        %v374 = vunpack.c.l.b16 %v335
        %v375 = vunpack.c.l.b16 %v336
        %v376 = vunpack.c.l.b16 %v337
        %v377 = vunpack.c.l.b16 %v338
        %v378 = vunpack.c.l.b16 %v339
        %v379 = vunpack.c.l.b16 %v340
        %v380 = vunpack.c.l.b16 %v341
        %v381 = vunpack.c.l.b16 %v342
        %v382 = vunpack.c.l.b16 %v343
        %v383 = vunpack.c.l.b16 %v344
        %v384 = vunpack.c.l.b16 %v345
        %v385 = vunpack.c.l.b16 %v346
        %v386 = vunpack.c.l.b16 %v347
        %v387 = vunpack.c.l.b16 %v348
        %v388 = vunpack.c.l.b16 %v349
        %v389 = vpack.c.b16 %v374, %v373
        %v390 = vpack.c.b16 %v376, %v375
        %v391 = vpack.c.b16 %v378, %v377
        %v392 = vpack.c.b16 %v380, %v379
        %v393 = vpack.c.b16 %v382, %v381
        %v394 = vpack.c.b16 %v384, %v383
        %v395 = vpack.c.b16 %v386, %v385
        %v396 = vpack.c.b16 %v388, %v387
        %405 = vmatprep.subr.bf16.mxu0 0
        %406 = vmatpush1.bf16.msra.mxu0 %v396
        %407 = vmatprep.subr.bf16.mxu0 0
        %408 = vmatpush1.bf16.msra.mxu0 %v395
        %409 = vmatprep.subr.bf16.mxu0 0
        %410 = vmatpush1.bf16.msra.mxu0 %v394
        %411 = vmatprep.subr.bf16.mxu0 0
        %412 = vmatpush1.bf16.msra.mxu0 %v393
        %413 = vmatprep.subr.bf16.mxu0 0
        %414 = vmatpush1.bf16.msra.mxu0 %v392
        %415 = vmatprep.subr.bf16.mxu0 0
        %416 = vmatpush1.bf16.msra.mxu0 %v391
        %417 = vmatprep.subr.bf16.mxu0 0
        %418 = vmatpush1.bf16.msra.mxu0 %v390
        %419 = vmatprep.subr.bf16.mxu0 0
        %420 = vmatpush1.bf16.msra.mxu0 %v389
        %421 = vmatprep.subr.bf16.mxu0 0
        %422 = vmatpush2.bf16.msra.mxu0 0
        %423 = vmatprep.subr.bf16.mxu0 0
        %424 = vmatpush2.bf16.msra.mxu0 0
        %425 = vmatprep.subr.bf16.mxu0 0
        %426 = vmatpush2.bf16.msra.mxu0 0
        %427 = vmatprep.subr.bf16.mxu0 0
        %428 = vmatpush2.bf16.msra.mxu0 0
        %429 = vmatprep.subr.bf16.mxu0 0
        %430 = vmatpush2.bf16.msra.mxu0 0
        %431 = vmatprep.subr.bf16.mxu0 0
        %432 = vmatpush2.bf16.msra.mxu0 0
        %433 = vmatprep.subr.bf16.mxu0 0
        %434 = vmatpush2.bf16.msra.mxu0 0
        %435 = vmatprep.subr.bf16.mxu0 0
        %436 = vmatpush2.bf16.msra.mxu0 0
        %437 = vmatprep.mubr.bf16.mxu0 0
        %438 = vmatmul.mubr.bf16.gmra.mxu0 %v333
        %v439 = vpop.f32.mrf.mxu0
        %v440 = vadd.f32 %v355, %v439
        %v441 = vpop.f32.mrf.mxu0
        %v442 = vpop.f32.mrf.mxu0
        %v443 = vpop.f32.mrf.mxu0
        %444 = vdwg.mxu0
        %v445 = vmul.f32 %v440, %v440
        %v446 = vmul.f32 %v440, %v445
        %v447 = vmul.f32 %v446, 0.044715
        %v448 = vadd.f32 %v440, %v447
        %v449 = vmul.f32 %v448, 0.7978846
        %v450 = vtanh.pop %v449
        %v451 = vadd.f32 %v450, 1.0
        %v452 = vmul.f32 %v451, 0.5
        %v453 = vmul.f32 %v440, %v452
        %v454 = vpack.c.bf16 %v453, %v453
        %v455 = vld [vmem:[#allocation5] sm:$0xf]
        %v456 = vld [vmem:[#allocation5 + $0x4] sm:$0xf]
        %v457 = vld [vmem:[#allocation5 + $0x8] sm:$0xf]
        %v458 = vld [vmem:[#allocation5 + $0xc] sm:$0xf]
        %v459 = vld [vmem:[#allocation5 + $0x10] sm:$0xf]
        %v460 = vld [vmem:[#allocation5 + $0x14] sm:$0xf]
        %v461 = vld [vmem:[#allocation5 + $0x18] sm:$0xf]
        %v462 = vld [vmem:[#allocation5 + $0x1c] sm:$0xf]
        %v463 = vld [vmem:[#allocation5 + $0x20] sm:$0xf]
        %v464 = vld [vmem:[#allocation5 + $0x24] sm:$0xf]
        %v465 = vld [vmem:[#allocation5 + $0x28] sm:$0xf]
        %v466 = vld [vmem:[#allocation5 + $0x2c] sm:$0xf]
        %v467 = vld [vmem:[#allocation5 + $0x30] sm:$0xf]
        %v468 = vld [vmem:[#allocation5 + $0x34] sm:$0xf]
        %v469 = vld [vmem:[#allocation5 + $0x38] sm:$0xf]
        %v470 = vld [vmem:[#allocation5 + $0x3c] sm:$0xf]
        %v471 = vld [vmem:[%s5] sm:$0x1]
        %v473 = vlaneseq
        %v474 = vshrl.u32 %v473, 7
        %v475 = vsub.s32 0, %v474
        %v476 = vrot.slane %v471, %v475
        %v494 = vunpack.c.l.b16 %v455
        %v495 = vunpack.c.l.b16 %v456
        %v496 = vunpack.c.l.b16 %v457
        %v497 = vunpack.c.l.b16 %v458
        %v498 = vunpack.c.l.b16 %v459
        %v499 = vunpack.c.l.b16 %v460
        %v500 = vunpack.c.l.b16 %v461
        %v501 = vunpack.c.l.b16 %v462
        %v502 = vunpack.c.l.b16 %v463
        %v503 = vunpack.c.l.b16 %v464
        %v504 = vunpack.c.l.b16 %v465
        %v505 = vunpack.c.l.b16 %v466
        %v506 = vunpack.c.l.b16 %v467
        %v507 = vunpack.c.l.b16 %v468
        %v508 = vunpack.c.l.b16 %v469
        %v509 = vunpack.c.l.b16 %v470
        %v510 = vpack.c.b16 %v495, %v494
        %v511 = vpack.c.b16 %v497, %v496
        %v512 = vpack.c.b16 %v499, %v498
        %v513 = vpack.c.b16 %v501, %v500
        %v514 = vpack.c.b16 %v503, %v502
        %v515 = vpack.c.b16 %v505, %v504
        %v516 = vpack.c.b16 %v507, %v506
        %v517 = vpack.c.b16 %v509, %v508
        %526 = vmatprep.subr.bf16.mxu0 0
        %527 = vmatpush1.bf16.msra.mxu0 %v517
        %528 = vmatprep.subr.bf16.mxu0 0
        %529 = vmatpush1.bf16.msra.mxu0 %v516
        %530 = vmatprep.subr.bf16.mxu0 0
        %531 = vmatpush1.bf16.msra.mxu0 %v515
        %532 = vmatprep.subr.bf16.mxu0 0
        %533 = vmatpush1.bf16.msra.mxu0 %v514
        %534 = vmatprep.subr.bf16.mxu0 0
        %535 = vmatpush1.bf16.msra.mxu0 %v513
        %536 = vmatprep.subr.bf16.mxu0 0
        %537 = vmatpush1.bf16.msra.mxu0 %v512
        %538 = vmatprep.subr.bf16.mxu0 0
        %539 = vmatpush1.bf16.msra.mxu0 %v511
        %540 = vmatprep.subr.bf16.mxu0 0
        %541 = vmatpush1.bf16.msra.mxu0 %v510
        %542 = vmatprep.subr.bf16.mxu0 0
        %543 = vmatpush2.bf16.msra.mxu0 0
        %544 = vmatprep.subr.bf16.mxu0 0
        %545 = vmatpush2.bf16.msra.mxu0 0
        %546 = vmatprep.subr.bf16.mxu0 0
        %547 = vmatpush2.bf16.msra.mxu0 0
        %548 = vmatprep.subr.bf16.mxu0 0
        %549 = vmatpush2.bf16.msra.mxu0 0
        %550 = vmatprep.subr.bf16.mxu0 0
        %551 = vmatpush2.bf16.msra.mxu0 0
        %552 = vmatprep.subr.bf16.mxu0 0
        %553 = vmatpush2.bf16.msra.mxu0 0
        %554 = vmatprep.subr.bf16.mxu0 0
        %555 = vmatpush2.bf16.msra.mxu0 0
        %556 = vmatprep.subr.bf16.mxu0 0
        %557 = vmatpush2.bf16.msra.mxu0 0
        %558 = vmatprep.mubr.bf16.mxu0 0
        %559 = vmatmul.mubr.bf16.gmra.mxu0 %v454
        %v560 = vpop.f32.mrf.mxu0
        %v561 = vadd.f32 %v476, %v560
        %v562 = vpop.f32.mrf.mxu0
        %v563 = vpop.f32.mrf.mxu0
        %v564 = vpop.f32.mrf.mxu0
        %565 = vdwg.mxu0
        %567 = vset.pattern.permute.xlu0 0
        %568 = vperm.xlu0 %567, %v332
        %v569 = vpop.permute.xlu0 %568
        %v571 = vmul.f32 %v569, %v561
        %572 = vst [vmem:[%s315] sm:$0xff] %v571
        %s573 = sand.u32 %s184, 1
        %s574 = scalar_lea.sflag [#allocation4], %s573
        %s575 = sand.u32 %s184, 1
        %s576 = smul.addr %s575, 8
        %s577 = scalar_lea.vmem [#allocation7], %s576
        // Predicated region
        $region53: #{tpu_custom_call.1} parent=43 // pred_check
          %p578 = pneg %p194
        $region54: #{tpu_custom_call.1} parent=43 // pred_check_branch
          %580 = sbr.rel (%p578) target = $region56
        $region55: #{tpu_custom_call.1} parent=43 // pred_region
          %s582 = ssub.s32 128, 128
          %583 = vsyncadd %s574, %s582
          %s584 = sadd.s32 %s27, %s26
          %s585 = smul.addr %s584, 128
          %s586 = scalar_lea.hbm %s6, %s585
          %s588 = sshll.u32 %s577, 4
          %s589 = int_to_ptr.vmem [resolvable:$true] %s588
          %591 = dma.vmem_to_hbm [thread:$0]  %s589, 128, %s586, %s574
        $region56: #{tpu_custom_call.1} parent=43 // pred_fallthru
          _
      $region44: #{tpu_custom_call.1} parent=5 // pred_fallthru
        _
      %p592 = scmp.le.s32.totalorder 2, %s17
      // Predicated region
      $region57: #{tpu_custom_call.1} parent=5 // pred_check
        %p593 = pneg %p592
      $region58: #{tpu_custom_call.1} parent=5 // pred_check_branch
        %595 = sbr.rel (%p593) target = $region60
      $region59: #{tpu_custom_call.1} parent=5 // pred_region
        %s596 = ssub.s32 %s17, 2
        // Predicated region
        $region61: #{tpu_custom_call.1} parent=59 // pred_check
          %p597 = pneg %p200
        $region62: #{tpu_custom_call.1} parent=59 // pred_check_branch
          %599 = sbr.rel (%p597) target = $region64
        $region63: #{tpu_custom_call.1} parent=59 // pred_region
          %s600 = sand.u32 %s185, 1
          %s601 = scalar_lea.sflag [#allocation4], %s600
          %s602 = sand.u32 %s185, 1
          %s603 = smul.addr %s602, 8
          %s604 = scalar_lea.vmem [#allocation7], %s603
          %605 = dma.done %s601, 128
        $region64: #{tpu_custom_call.1} parent=59 // pred_fallthru
          _
      $region60: #{tpu_custom_call.1} parent=5 // pred_fallthru
        _
    $region6: #{tpu_custom_call.1} parent=1 // loop_footer
      %s21 = sadd.s32 1, %s17
    $region7: #{tpu_custom_call.1} parent=1 // loop_footer_branch
      %16 = sbr.rel target = $region3
    $region8: #{tpu_custom_call.1} parent=1 // loop_exit
      _
    %606 = vsyncpa [#allocation3], 1
    %s607 = scalar_lea.sflag [#allocation3], 1
    %608 = vsyncpa %s607, 1
    %609 = vsyncpa [#allocation6], 1
    %610 = vsyncpa [#allocation4], 1
    %s611 = scalar_lea.sflag [#allocation4], 1
    %612 = vsyncpa %s611, 1

</llo_original>
